<compile_context>
chip_gen: v6e
topology: v6e:2x2x1
jax: 0.10.0
libtpu: 0.0.40
codegen_flags: <defaults>
</compile_context>

<pallas_src>
import functools

import jax
import jax.numpy as jnp
from jax import lax
from jax.experimental import pallas as pl
from jax.experimental.pallas import tpu as pltpu


def _round_up(x: int, m: int) -> int:
    return ((x + m - 1) // m) * m


def _hw_config():
    """Generation-aware tile caps / VMEM limit (queried once, eagerly)."""
    try:
        info = pltpu.get_tpu_info()
        cap = getattr(info, "vmem_capacity_bytes", None) or 64 * 1024 * 1024
    except Exception:  # interpret mode / unknown chip -> conservative defaults
        cap = 64 * 1024 * 1024
    if cap >= 100 * 1024 * 1024:
        # v5e / v6e: 128 MiB physical VMEM -> bigger tiles, raised scoped limit.
        return {"tm_cap": 1024, "tn_cap": 512, "tk_cap": 1024,
                "vmem_limit": 80 * 1024 * 1024}
    # v7x: 64 MiB physical -> stay within the 32 MiB scoped default.
    return {"tm_cap": 512, "tn_cap": 512, "tk_cap": 1024,
            "vmem_limit": 32 * 1024 * 1024}


_HW = _hw_config()


def _masked_linear_kernel(x_ref, w_ref, mask_ref, beff_ref, o_ref):
    k = pl.program_id(2)

    # Binarized int8 mask {0,1}: one vsel per vreg, no compare-vs-threshold.
    w_eff = jnp.where(mask_ref[...] != 0, w_ref[...], 0.0)

    # (tm, tk) x (tn, tk) contracted on axis 1 of both -> (tm, tn).
    # No transposed VMEM copy; Mosaic feeds the MXU with the K-major RHS.
    part = lax.dot_general(
        x_ref[...],
        w_eff,
        dimension_numbers=(((1,), (1,)), ((), ())),
        preferred_element_type=jnp.float32,
    )

    # Accumulate directly into the resident f32 output block (no acc scratch).
    @pl.when(k == 0)
    def _():
        o_ref[...] = part

    @pl.when(k > 0)
    def _():
        o_ref[...] += part

    @pl.when(k == pl.num_programs(2) - 1)
    def _():
        o_ref[...] += beff_ref[...]


@functools.partial(jax.jit, static_argnames=("threshold",))
def masked_linear(x, weight, mask_real, bias, bias_mask_real, threshold=0.01):
    """Pallas implementation of MaskedLinear.forward.

    x:              (M, K) float32
    weight:         (N, K) float32   (PyTorch F.linear convention)
    mask_real:      (N, K) float32
    bias:           (N,)   float32
    bias_mask_real: (N,)   float32
    returns:        (M, N) float32
    """
    M, K = x.shape
    N, K2 = weight.shape
    assert K == K2

    # --- tile sizes (MXU / lane aligned, generation-aware caps) ---
    tm = min(_HW["tm_cap"], _round_up(M, 8))
    tn = min(_HW["tn_cap"], _round_up(N, 128))
    tk = min(_HW["tk_cap"], _round_up(K, 128))

    Mp = _round_up(M, tm)
    Np = _round_up(N, tn)
    Kp = _round_up(K, tk)

    # Megacore (v7x has 2 TCs): if both parallel axes collapse to a single
    # block, split the N axis (prefer shrinking tn over tm) so j gives >= 2.
    if (Mp // tm) == 1 and (Np // tn) == 1 and Np % 256 == 0:
        tn = Np // 2

    # --- pad to tile multiples (zero padding is exact: padded weight entries
    #     are zero and the padded mask is zero, so padded products and the
    #     padded bias contribute nothing) ---
    xp = jnp.pad(x, ((0, Mp - M), (0, Kp - K)))
    wp = jnp.pad(weight, ((0, Np - N), (0, Kp - K)))

    # Binarize the mask in the wrapper; stream it as int8 {0,1} (cuts the
    # dominant NxK HBM traffic from 8 B/elem to 5 B/elem).
    mask_bin = (mask_real > threshold).astype(jnp.int8)
    mbp = jnp.pad(mask_bin, ((0, Np - N), (0, Kp - K)))

    # Hoist the bias path: binarize + mask once, outside the kernel, as (1, Np).
    b_eff = jnp.where(bias_mask_real > threshold, bias, 0.0).astype(jnp.float32)
    b_eff = jnp.pad(b_eff, (0, Np - N)).reshape(1, Np)

    grid = (Mp // tm, Np // tn, Kp // tk)
    gi, gj, _ = grid

    # Real traffic: weight + mask re-read grid_i times, x re-read grid_j times.
    cost = pl.CostEstimate(
        flops=2 * Mp * Np * Kp,
        transcendentals=0,
        bytes_accessed=(4 * Mp * Kp * gj            # x
                        + 4 * Np * Kp * gi          # weight (f32)
                        + 1 * Np * Kp * gi          # mask   (int8)
                        + 4 * Np * gi               # bias
                        + 4 * Mp * Np),             # output
    )

    out_padded = pl.pallas_call(
        _masked_linear_kernel,
        out_shape=jax.ShapeDtypeStruct((Mp, Np), jnp.float32),
        grid_spec=pltpu.PrefetchScalarGridSpec(
            num_scalar_prefetch=0,
            grid=grid,
            in_specs=[
                pl.BlockSpec((tm, tk), lambda i, j, k: (i, k)),   # x
                pl.BlockSpec((tn, tk), lambda i, j, k: (j, k)),   # weight
                pl.BlockSpec((tn, tk), lambda i, j, k: (j, k)),   # mask (int8)
                pl.BlockSpec((1, tn), lambda i, j, k: (0, j)),    # b_eff (hoisted)
            ],
            out_specs=pl.BlockSpec((tm, tn), lambda i, j, k: (i, j)),
        ),
        compiler_params=pltpu.CompilerParams(
            dimension_semantics=("parallel", "parallel", "arbitrary"),
            vmem_limit_bytes=_HW["vmem_limit"],
        ),
        cost_estimate=cost,
    )(xp, wp, mbp, b_eff)

    return out_padded[:M, :N].astype(x.dtype)


def masked_linear_ref(x, weight, mask_real, bias, bias_mask_real, threshold=0.01):
    """Pure-JAX reference matching the PyTorch forward."""
    w_eff = jnp.where(mask_real > threshold, 1.0, 0.0) * weight
    b_eff = jnp.where(bias_mask_real > threshold, 1.0, 0.0) * bias
    return x @ w_eff.T + b_eff


if __name__ == "__main__":
    # Module hyper-params (defaults from __init__).
    mask_scale = 0.02
    threshold = 0.01
    initial_sparsity = 0.1

    # Small shapes: batch=8, in_features=32, out_features=64.
    M, K, N = 8, 32, 64

    key = jax.random.PRNGKey(0)
    k_x, k_w, k_b, k_m, k_bm = jax.random.split(key, 5)

    x = jax.random.normal(k_x, (M, K), dtype=jnp.float32)
    weight = jax.random.normal(k_w, (N, K), dtype=jnp.float32) * 0.1
    bias = jax.random.normal(k_b, (N,), dtype=jnp.float32) * 0.1

    # mask_init == 'uniform': uniform_(-mask_scale, (mask_scale+threshold)/sparsity - mask_scale)
    left_scale = -mask_scale
    right_scale = (mask_scale + threshold) / initial_sparsity - mask_scale
    mask_real = jax.random.uniform(
        k_m, (N, K), dtype=jnp.float32, minval=left_scale, maxval=right_scale)
    bias_mask_real = jax.random.uniform(
        k_bm, (N,), dtype=jnp.float32, minval=left_scale, maxval=right_scale)

    out = masked_linear(x, weight, mask_real, bias, bias_mask_real, threshold)
    out = jax.block_until_ready(out)

    ref = masked_linear_ref(x, weight, mask_real, bias, bias_mask_real, threshold)
    assert out.shape == (M, N)
    assert jnp.allclose(out, ref, atol=1e-5, rtol=1e-5), "mismatch vs reference"

    print("KERNEL_OK")
</pallas_src>

<mosaic_0001>
module attributes {stable_mosaic.version = 11 : i64} {
  func.func @_masked_linear_kernel(%arg0: i32, %arg1: i32, %arg2: i32, %arg3: memref<8x128xf32, #tpu.memory_space<vmem>>, %arg4: memref<128x128xf32, #tpu.memory_space<vmem>>, %arg5: memref<128x128xi8, #tpu.memory_space<vmem>>, %arg6: memref<1x128xf32, #tpu.memory_space<vmem>>, %arg7: memref<8x128xf32, #tpu.memory_space<vmem>>) attributes {dimension_semantics = [#tpu.dimension_semantics<parallel>, #tpu.dimension_semantics<parallel>, #tpu.dimension_semantics<arbitrary>], iteration_bounds = array<i64: 1, 1, 1>, scalar_prefetch = 0 : i64, scratch_operands = 0 : i64, tpu.core_type = #tpu.core_type<tc>, window_params = [{transform_indices = @transform_0, window_bounds = array<i64: 8, 128>}, {transform_indices = @transform_1, window_bounds = array<i64: 128, 128>}, {transform_indices = @transform_2, window_bounds = array<i64: 128, 128>}, {transform_indices = @transform_3, window_bounds = array<i64: 1, 128>}, {transform_indices = @transform_4, window_bounds = array<i64: 8, 128>}]} {
    %c0 = arith.constant 0 : index
    %c0_0 = arith.constant 0 : index
    %0 = vector.load %arg5[%c0, %c0_0] : memref<128x128xi8, #tpu.memory_space<vmem>>, vector<128x128xi8>
    %c0_i8 = arith.constant 0 : i8
    %1 = vector.broadcast %c0_i8 : i8 to vector<128x128xi8>
    %2 = arith.cmpi ne, %0, %1 : vector<128x128xi8>
    %c0_1 = arith.constant 0 : index
    %c0_2 = arith.constant 0 : index
    %3 = vector.load %arg4[%c0_1, %c0_2] : memref<128x128xf32, #tpu.memory_space<vmem>>, vector<128x128xf32>
    %cst = arith.constant 0.000000e+00 : f32
    %4 = vector.broadcast %cst : f32 to vector<128x128xf32>
    %5 = arith.select %2, %3, %4 : vector<128x128xi1>, vector<128x128xf32>
    %c0_3 = arith.constant 0 : index
    %c0_4 = arith.constant 0 : index
    %6 = vector.load %arg3[%c0_3, %c0_4] : memref<8x128xf32, #tpu.memory_space<vmem>>, vector<8x128xf32>
    %cst_5 = arith.constant dense<0.000000e+00> : vector<8x128xf32>
    %7 = tpu.matmul %6, %5, %cst_5 {dimension_numbers = #tpu.dot_dimension_numbers<[1], [1], [0], [0], [0, 0, 1, 0], [], []>} : vector<8x128xf32>, vector<128x128xf32>, vector<8x128xf32> -> vector<8x128xf32>
    %c0_i32 = arith.constant 0 : i32
    %8 = arith.cmpi eq, %arg2, %c0_i32 : i32
    %9 = arith.extui %8 : i1 to i32
    %c0_i32_6 = arith.constant 0 : i32
    %10 = arith.cmpi ne, %9, %c0_i32_6 : i32
    scf.if %10 {
      %c0_11 = arith.constant 0 : index
      %c0_12 = arith.constant 0 : index
      %17 = vector.load %arg7[%c0_11, %c0_12] : memref<8x128xf32, #tpu.memory_space<vmem>>, vector<8x128xf32>
      tpu.vector_store %arg7[%c0_11, %c0_12], %7 {strides = array<i32>} : memref<8x128xf32, #tpu.memory_space<vmem>>, vector<8x128xf32>,
    } else {
    }
    %c0_i32_7 = arith.constant 0 : i32
    %11 = arith.cmpi sgt, %arg2, %c0_i32_7 : i32
    %12 = arith.extui %11 : i1 to i32
    %c0_i32_8 = arith.constant 0 : i32
    %13 = arith.cmpi ne, %12, %c0_i32_8 : i32
    scf.if %13 {
      %c0_11 = arith.constant 0 : index
      %c0_12 = arith.constant 0 : index
      %17 = vector.load %arg7[%c0_11, %c0_12] : memref<8x128xf32, #tpu.memory_space<vmem>>, vector<8x128xf32>
      %18 = arith.addf %17, %7 : vector<8x128xf32>
      %c0_13 = arith.constant 0 : index
      %c0_14 = arith.constant 0 : index
      %19 = vector.load %arg7[%c0_13, %c0_14] : memref<8x128xf32, #tpu.memory_space<vmem>>, vector<8x128xf32>
      tpu.vector_store %arg7[%c0_13, %c0_14], %18 {strides = array<i32>} : memref<8x128xf32, #tpu.memory_space<vmem>>, vector<8x128xf32>,
    } else {
    }
    %c0_i32_9 = arith.constant 0 : i32
    %14 = arith.cmpi eq, %arg2, %c0_i32_9 : i32
    %15 = arith.extui %14 : i1 to i32
    %c0_i32_10 = arith.constant 0 : i32
    %16 = arith.cmpi ne, %15, %c0_i32_10 : i32
    scf.if %16 {
      %c0_11 = arith.constant 0 : index
      %c0_12 = arith.constant 0 : index
      %17 = vector.load %arg7[%c0_11, %c0_12] : memref<8x128xf32, #tpu.memory_space<vmem>>, vector<8x128xf32>
      %c0_13 = arith.constant 0 : index
      %c0_14 = arith.constant 0 : index
      %18 = vector.load %arg6[%c0_13, %c0_14] : memref<1x128xf32, #tpu.memory_space<vmem>>, vector<1x128xf32>
      %19 = vector.broadcast %18 : vector<1x128xf32> to vector<8x128xf32>
      %20 = arith.addf %17, %19 : vector<8x128xf32>
      %c0_15 = arith.constant 0 : index
      %c0_16 = arith.constant 0 : index
      %21 = vector.load %arg7[%c0_15, %c0_16] : memref<8x128xf32, #tpu.memory_space<vmem>>, vector<8x128xf32>
      tpu.vector_store %arg7[%c0_15, %c0_16], %20 {strides = array<i32>} : memref<8x128xf32, #tpu.memory_space<vmem>>, vector<8x128xf32>,
    } else {
    }
    return
  }
  func.func @transform_0(%arg0: i32, %arg1: i32, %arg2: i32) -> (i32, i32) {
    %c0_i32 = arith.constant 0 : i32
    return %arg0, %arg2 : i32, i32
  }
  func.func @transform_1(%arg0: i32, %arg1: i32, %arg2: i32) -> (i32, i32) {
    %c0_i32 = arith.constant 0 : i32
    return %arg1, %arg2 : i32, i32
  }
  func.func @transform_2(%arg0: i32, %arg1: i32, %arg2: i32) -> (i32, i32) {
    %c0_i32 = arith.constant 0 : i32
    return %arg1, %arg2 : i32, i32
  }
  func.func @transform_3(%arg0: i32, %arg1: i32, %arg2: i32) -> (i32, i32) {
    %c0_i32 = arith.constant 0 : i32
    %c0_i32_0 = arith.constant 0 : i32
    return %c0_i32, %arg1 : i32, i32
  }
  func.func @transform_4(%arg0: i32, %arg1: i32, %arg2: i32) -> (i32, i32) {
    %c0_i32 = arith.constant 0 : i32
    return %arg0, %arg1 : i32, i32
  }
}

</mosaic_0001>

<llo_original>
// kernel: masked_linear.1
$region0: #{masked_linear.1}
  #allocation0 [shape = 'u32[]', space=smem, size = 0x4, offset = 0x4, fixed_abs, tag = 'smem constant byte address 0x4 - core index']
  #allocation1 [shape = 'u32[144,128]{1,0:T(1,128)}', space=vmem, size = 0x12000, scoped, tag = 'internal scratch']
  %s0 = inlined_call_operand.vmem [shape: f32[8,128], index: 0, kind: input, shape index: {}]
  %s1 = inlined_call_operand.vmem [shape: f32[128,128], index: 1, kind: input, shape index: {}]
  %s2 = inlined_call_operand.vmem [shape: s8[128,128], index: 2, kind: input, shape index: {}]
  %s3 = inlined_call_operand.vmem [shape: f32[1,128], index: 3, kind: input, shape index: {}]
  %s4 = inlined_call_operand.hbm [shape: f32[8,128], index: 4, kind: output, shape index: {}]
  %s5 = sld [smem:[#allocation0]]
  $region38: #{masked_linear.1} parent=0
    _
  %s7 = ssub.s32 1, %s5
  %s8 = scalar_select 0, %s7, %s5
  $region1: #{masked_linear.1} parent=0
    #allocation2 [shape = 'u8[4096]{0}', space=vmem, size = 0x1000, scoped, tag = 'output window, operand 0, single buffered']
    #allocation3 [shape = 's32[1]{0}', space=sflag, size = 0x4, scoped, tag = 'scoped memory for masked_linear.1']
    %9 = vsyncpa [#allocation3], 0
    // Predicated region
    $region2: #{masked_linear.1} parent=1 // pred_check
      _
    $region3: #{masked_linear.1} parent=1 // pred_check_branch
      %11 = sbr.rel (0) target = $region5
    $region4: #{masked_linear.1} parent=1 // pred_region
      _
    $region5: #{masked_linear.1} parent=1 // pred_fallthru
      _
    // Predicated region
    $region6: #{masked_linear.1} parent=1 // pred_check
      _
    $region7: #{masked_linear.1} parent=1 // pred_check_branch
      %13 = sbr.rel (0) target = $region9
    $region8: #{masked_linear.1} parent=1 // pred_region
      _
    $region9: #{masked_linear.1} parent=1 // pred_fallthru
      _
    // Predicated region
    $region10: #{masked_linear.1} parent=1 // pred_check
      _
    $region11: #{masked_linear.1} parent=1 // pred_check_branch
      %15 = sbr.rel (0) target = $region13
    $region12: #{masked_linear.1} parent=1 // pred_region
      _
    $region13: #{masked_linear.1} parent=1 // pred_fallthru
      _
    // Predicated region
    $region14: #{masked_linear.1} parent=1 // pred_check
      _
    $region15: #{masked_linear.1} parent=1 // pred_check_branch
      %17 = sbr.rel (0) target = $region17
    $region16: #{masked_linear.1} parent=1 // pred_region
      _
    $region17: #{masked_linear.1} parent=1 // pred_fallthru
      _
    %v20 = vld [vmem:[%s2] sm:$0xff]
    %v21 = vld [vmem:[%s2 + $0x8] sm:$0xff]
    %v22 = vld [vmem:[%s2 + $0x10] sm:$0xff]
    %v23 = vld [vmem:[%s2 + $0x18] sm:$0xff]
    %vm24 = vnez %v20
    %vm25 = vnez %v21
    %vm26 = vnez %v22
    %vm27 = vnez %v23
    %v28 = vld [vmem:[%s1] sm:$0xff]
    %v29 = vld [vmem:[%s1 + $0x8] sm:$0xff]
    %v30 = vld [vmem:[%s1 + $0x10] sm:$0xff]
    %v31 = vld [vmem:[%s1 + $0x18] sm:$0xff]
    %v32 = vld [vmem:[%s1 + $0x20] sm:$0xff]
    %v33 = vld [vmem:[%s1 + $0x28] sm:$0xff]
    %v34 = vld [vmem:[%s1 + $0x30] sm:$0xff]
    %v35 = vld [vmem:[%s1 + $0x38] sm:$0xff]
    %v36 = vld [vmem:[%s1 + $0x40] sm:$0xff]
    %v37 = vld [vmem:[%s1 + $0x48] sm:$0xff]
    %v38 = vld [vmem:[%s1 + $0x50] sm:$0xff]
    %v39 = vld [vmem:[%s1 + $0x58] sm:$0xff]
    %v40 = vld [vmem:[%s1 + $0x60] sm:$0xff]
    %v41 = vld [vmem:[%s1 + $0x68] sm:$0xff]
    %v42 = vld [vmem:[%s1 + $0x70] sm:$0xff]
    %v43 = vld [vmem:[%s1 + $0x78] sm:$0xff]
    %v44 = vsel %vm24, 16843009, 0
    %v45 = vsel %vm25, 16843009, 0
    %v46 = vsel %vm26, 16843009, 0
    %v47 = vsel %vm27, 16843009, 0
    %v48 = vunpack.c.0.s8 %v44
    %v49 = vunpack.c.1.s8 %v44
    %v50 = vunpack.c.2.s8 %v44
    %v51 = vunpack.c.3.s8 %v44
    %v52 = vunpack.c.0.s8 %v45
    %v53 = vunpack.c.1.s8 %v45
    %v54 = vunpack.c.2.s8 %v45
    %v55 = vunpack.c.3.s8 %v45
    %v56 = vunpack.c.0.s8 %v46
    %v57 = vunpack.c.1.s8 %v46
    %v58 = vunpack.c.2.s8 %v46
    %v59 = vunpack.c.3.s8 %v46
    %v60 = vunpack.c.0.s8 %v47
    %v61 = vunpack.c.1.s8 %v47
    %v62 = vunpack.c.2.s8 %v47
    %v63 = vunpack.c.3.s8 %v47
    %v64 = vpack.c.b16 %v48, %v48
    %v65 = vpack.c.b8 %v64, %v64
    %v66 = vpack.c.b16 %v49, %v49
    %v67 = vpack.c.b8 %v66, %v66
    %v68 = vpack.c.b16 %v50, %v50
    %v69 = vpack.c.b8 %v68, %v68
    %v70 = vpack.c.b16 %v51, %v51
    %v71 = vpack.c.b8 %v70, %v70
    %v72 = vpack.c.b16 %v52, %v52
    %v73 = vpack.c.b8 %v72, %v72
    %v74 = vpack.c.b16 %v53, %v53
    %v75 = vpack.c.b8 %v74, %v74
    %v76 = vpack.c.b16 %v54, %v54
    %v77 = vpack.c.b8 %v76, %v76
    %v78 = vpack.c.b16 %v55, %v55
    %v79 = vpack.c.b8 %v78, %v78
    %v80 = vpack.c.b16 %v56, %v56
    %v81 = vpack.c.b8 %v80, %v80
    %v82 = vpack.c.b16 %v57, %v57
    %v83 = vpack.c.b8 %v82, %v82
    %v84 = vpack.c.b16 %v58, %v58
    %v85 = vpack.c.b8 %v84, %v84
    %v86 = vpack.c.b16 %v59, %v59
    %v87 = vpack.c.b8 %v86, %v86
    %v88 = vpack.c.b16 %v60, %v60
    %v89 = vpack.c.b8 %v88, %v88
    %v90 = vpack.c.b16 %v61, %v61
    %v91 = vpack.c.b8 %v90, %v90
    %v92 = vpack.c.b16 %v62, %v62
    %v93 = vpack.c.b8 %v92, %v92
    %v94 = vpack.c.b16 %v63, %v63
    %v95 = vpack.c.b8 %v94, %v94
    %vm96 = vnez %v65
    %vm97 = vnez %v67
    %vm98 = vnez %v69
    %vm99 = vnez %v71
    %vm100 = vnez %v73
    %vm101 = vnez %v75
    %vm102 = vnez %v77
    %vm103 = vnez %v79
    %vm104 = vnez %v81
    %vm105 = vnez %v83
    %vm106 = vnez %v85
    %vm107 = vnez %v87
    %vm108 = vnez %v89
    %vm109 = vnez %v91
    %vm110 = vnez %v93
    %vm111 = vnez %v95
    %v112 = vsel %vm96, 16843009, 0
    %v113 = vsel %vm97, 16843009, 0
    %v114 = vsel %vm98, 16843009, 0
    %v115 = vsel %vm99, 16843009, 0
    %v116 = vsel %vm100, 16843009, 0
    %v117 = vsel %vm101, 16843009, 0
    %v118 = vsel %vm102, 16843009, 0
    %v119 = vsel %vm103, 16843009, 0
    %v120 = vsel %vm104, 16843009, 0
    %v121 = vsel %vm105, 16843009, 0
    %v122 = vsel %vm106, 16843009, 0
    %v123 = vsel %vm107, 16843009, 0
    %v124 = vsel %vm108, 16843009, 0
    %v125 = vsel %vm109, 16843009, 0
    %v126 = vsel %vm110, 16843009, 0
    %v127 = vsel %vm111, 16843009, 0
    %v128 = vunpack.c.0.s8 %v112
    %v129 = vunpack.c.0.s8 %v113
    %v130 = vunpack.c.0.s8 %v114
    %v131 = vunpack.c.0.s8 %v115
    %v132 = vunpack.c.0.s8 %v116
    %v133 = vunpack.c.0.s8 %v117
    %v134 = vunpack.c.0.s8 %v118
    %v135 = vunpack.c.0.s8 %v119
    %v136 = vunpack.c.0.s8 %v120
    %v137 = vunpack.c.0.s8 %v121
    %v138 = vunpack.c.0.s8 %v122
    %v139 = vunpack.c.0.s8 %v123
    %v140 = vunpack.c.0.s8 %v124
    %v141 = vunpack.c.0.s8 %v125
    %v142 = vunpack.c.0.s8 %v126
    %v143 = vunpack.c.0.s8 %v127
    %vm144 = vcmp.ne.s32.totalorder %v128, 0
    %vm145 = vcmp.ne.s32.totalorder %v129, 0
    %vm146 = vcmp.ne.s32.totalorder %v130, 0
    %vm147 = vcmp.ne.s32.totalorder %v131, 0
    %vm148 = vcmp.ne.s32.totalorder %v132, 0
    %vm149 = vcmp.ne.s32.totalorder %v133, 0
    %vm150 = vcmp.ne.s32.totalorder %v134, 0
    %vm151 = vcmp.ne.s32.totalorder %v135, 0
    %vm152 = vcmp.ne.s32.totalorder %v136, 0
    %vm153 = vcmp.ne.s32.totalorder %v137, 0
    %vm154 = vcmp.ne.s32.totalorder %v138, 0
    %vm155 = vcmp.ne.s32.totalorder %v139, 0
    %vm156 = vcmp.ne.s32.totalorder %v140, 0
    %vm157 = vcmp.ne.s32.totalorder %v141, 0
    %vm158 = vcmp.ne.s32.totalorder %v142, 0
    %vm159 = vcmp.ne.s32.totalorder %v143, 0
    %v160 = vsel %vm144, %v28, 0.0
    %v161 = vsel %vm145, %v29, 0.0
    %v162 = vsel %vm146, %v30, 0.0
    %v163 = vsel %vm147, %v31, 0.0
    %v164 = vsel %vm148, %v32, 0.0
    %v165 = vsel %vm149, %v33, 0.0
    %v166 = vsel %vm150, %v34, 0.0
    %v167 = vsel %vm151, %v35, 0.0
    %v168 = vsel %vm152, %v36, 0.0
    %v169 = vsel %vm153, %v37, 0.0
    %v170 = vsel %vm154, %v38, 0.0
    %v171 = vsel %vm155, %v39, 0.0
    %v172 = vsel %vm156, %v40, 0.0
    %v173 = vsel %vm157, %v41, 0.0
    %v174 = vsel %vm158, %v42, 0.0
    %v175 = vsel %vm159, %v43, 0.0
    %v176 = vld [vmem:[%s0] sm:$0xff]
    %177 = vmatprep.subr.mxu0 0.0
    %178 = vmatpush1.xpose.msra.mxu0 %v175
    %179 = vmatprep.subr.mxu0 0.0
    %180 = vmatpush1.xpose.msra.mxu0 %v174
    %181 = vmatprep.subr.mxu0 0.0
    %182 = vmatpush1.xpose.msra.mxu0 %v173
    %183 = vmatprep.subr.mxu0 0.0
    %184 = vmatpush1.xpose.msra.mxu0 %v172
    %185 = vmatprep.subr.mxu0 0.0
    %186 = vmatpush1.xpose.msra.mxu0 %v171
    %187 = vmatprep.subr.mxu0 0.0
    %188 = vmatpush1.xpose.msra.mxu0 %v170
    %189 = vmatprep.subr.mxu0 0.0
    %190 = vmatpush1.xpose.msra.mxu0 %v169
    %191 = vmatprep.subr.mxu0 0.0
    %192 = vmatpush1.xpose.msra.mxu0 %v168
    %193 = vmatprep.subr.mxu0 0.0
    %194 = vmatpush1.xpose.msra.mxu0 %v167
    %195 = vmatprep.subr.mxu0 0.0
    %196 = vmatpush1.xpose.msra.mxu0 %v166
    %197 = vmatprep.subr.mxu0 0.0
    %198 = vmatpush1.xpose.msra.mxu0 %v165
    %199 = vmatprep.subr.mxu0 0.0
    %200 = vmatpush1.xpose.msra.mxu0 %v164
    %201 = vmatprep.subr.mxu0 0.0
    %202 = vmatpush1.xpose.msra.mxu0 %v163
    %203 = vmatprep.subr.mxu0 0.0
    %204 = vmatpush1.xpose.msra.mxu0 %v162
    %205 = vmatprep.subr.mxu0 0.0
    %206 = vmatpush1.xpose.msra.mxu0 %v161
    %207 = vmatprep.subr.mxu0 0.0
    %208 = vmatpush1.xpose.msra.mxu0 %v160
    %209 = vmatprep.subr.mxu0 0.0
    %210 = vmatpush2.xpose.msra.mxu0 0.0
    %211 = vmatprep.subr.mxu0 0.0
    %212 = vmatpush2.xpose.msra.mxu0 0.0
    %213 = vmatprep.subr.mxu0 0.0
    %214 = vmatpush2.xpose.msra.mxu0 0.0
    %215 = vmatprep.subr.mxu0 0.0
    %216 = vmatpush2.xpose.msra.mxu0 0.0
    %217 = vmatprep.subr.mxu0 0.0
    %218 = vmatpush2.xpose.msra.mxu0 0.0
    %219 = vmatprep.subr.mxu0 0.0
    %220 = vmatpush2.xpose.msra.mxu0 0.0
    %221 = vmatprep.subr.mxu0 0.0
    %222 = vmatpush2.xpose.msra.mxu0 0.0
    %223 = vmatprep.subr.mxu0 0.0
    %224 = vmatpush2.xpose.msra.mxu0 0.0
    %225 = vmatprep.subr.mxu0 0.0
    %226 = vmatpush2.xpose.msra.mxu0 0.0
    %227 = vmatprep.subr.mxu0 0.0
    %228 = vmatpush2.xpose.msra.mxu0 0.0
    %229 = vmatprep.subr.mxu0 0.0
    %230 = vmatpush2.xpose.msra.mxu0 0.0
    %231 = vmatprep.subr.mxu0 0.0
    %232 = vmatpush2.xpose.msra.mxu0 0.0
    %233 = vmatprep.subr.mxu0 0.0
    %234 = vmatpush2.xpose.msra.mxu0 0.0
    %235 = vmatprep.subr.mxu0 0.0
    %236 = vmatpush2.xpose.msra.mxu0 0.0
    %237 = vmatprep.subr.mxu0 0.0
    %238 = vmatpush2.xpose.msra.mxu0 0.0
    %239 = vmatprep.subr.mxu0 0.0
    %240 = vmatpush2.xpose.msra.mxu0 0.0
    %241 = vmatprep.mubr.f32.mxu0 0.0
    %242 = vmatmul.mubr.f32.gmra.mxu0 %v176
    %v243 = vpop.f32.mrf.mxu0
    %v244 = vadd.f32 0.0, %v243
    %v245 = vpop.f32.mrf.mxu0
    %246 = vdwg.mxu0
    %p247 = scmp.eq.s32.totalorder 0, 0
    // Predicated region
    $region18: #{masked_linear.1} parent=1 // pred_check
      %p248 = pneg %p247
    $region19: #{masked_linear.1} parent=1 // pred_check_branch
      %250 = sbr.rel (%p248) target = $region21
    $region20: #{masked_linear.1} parent=1 // pred_region
      %251 = vst [vmem:[#allocation2] sm:$0xff] %v244
    $region21: #{masked_linear.1} parent=1 // pred_fallthru
      _
    %p252 = scmp.gt.s32.totalorder 0, 0
    // Predicated region
    $region22: #{masked_linear.1} parent=1 // pred_check
      %p253 = pneg %p252
    $region23: #{masked_linear.1} parent=1 // pred_check_branch
      %255 = sbr.rel (%p253) target = $region25
    $region24: #{masked_linear.1} parent=1 // pred_region
      %v256 = vld [vmem:[#allocation2] sm:$0xff]
      %v257 = vadd.f32 %v256, %v244
      %258 = vst [vmem:[#allocation2] sm:$0xff] %v257
    $region25: #{masked_linear.1} parent=1 // pred_fallthru
      _
    // Predicated region
    $region26: #{masked_linear.1} parent=1 // pred_check
      %p259 = pneg %p247
    $region27: #{masked_linear.1} parent=1 // pred_check_branch
      %261 = sbr.rel (%p259) target = $region29
    $region28: #{masked_linear.1} parent=1 // pred_region
      %v262 = vld [vmem:[#allocation2] sm:$0xff]
      %v263 = vld [vmem:[%s3] sm:$0x1]
      %v265 = vlaneseq
      %v266 = vshrl.u32 %v265, 7
      %v267 = vsub.s32 0, %v266
      %v268 = vrot.slane %v263, %v267
      %v270 = vadd.f32 %v262, %v268
      %271 = vst [vmem:[#allocation2] sm:$0xff] %v270
    $region29: #{masked_linear.1} parent=1 // pred_fallthru
      _
    // Predicated region
    $region30: #{masked_linear.1} parent=1 // pred_check
      _
    $region31: #{masked_linear.1} parent=1 // pred_check_branch
      %273 = sbr.rel (0) target = $region33
    $region32: #{masked_linear.1} parent=1 // pred_region
      %s275 = ssub.s32 128, 128
      %276 = vsyncadd [#allocation3], %s275
      %s278 = sshll.u32 [#allocation2], 4
      %s279 = int_to_ptr.vmem [resolvable:$true] %s278
      %281 = dma.vmem_to_hbm [thread:$0]  %s279, 128, %s4, [#allocation3]
    $region33: #{masked_linear.1} parent=1 // pred_fallthru
      _
    // Predicated region
    $region34: #{masked_linear.1} parent=1 // pred_check
      _
    $region35: #{masked_linear.1} parent=1 // pred_check_branch
      %283 = sbr.rel (0) target = $region37
    $region36: #{masked_linear.1} parent=1 // pred_region
      %284 = dma.done [#allocation3], 128
    $region37: #{masked_linear.1} parent=1 // pred_fallthru
      _
    %285 = vsyncpa [#allocation3], 1

</llo_original>
